<compile_context>
chip_gen: v5e
topology: v5e:2x2
jax: 0.10.0
libtpu: 0.0.40
codegen_flags: <defaults>
</compile_context>

<pallas_src>
import functools

import jax
import jax.numpy as jnp
from jax import lax
from jax.experimental import pallas as pl
from jax.experimental.pallas import tpu as pltpu

VMEM = pltpu.MemorySpace.VMEM
LANE = 128
SUBLANE = 8


def _round_up(x, m):
    return ((x + m - 1) // m) * m


# ----------------------------------------------------------------------------
# Fused RESK forward kernel.
#   GraphConvolution(h, adj) = adj @ (h @ W) + b
#   forward = log_softmax( gc_out( residual-stack( relu(gc_in(x)) ) ) )
# All layer weights, adj, and activations stay resident in VMEM.
# ----------------------------------------------------------------------------
def _resk_kernel(x_ref, adj_ref, w_in_ref, b_in_ref, w_mid_ref, b_mid_ref,
                 w_out_ref, b_out_ref, o_ref, *,
                 n_mid, residue_layers, nclass, use_bf16):
    mm_dtype = jnp.bfloat16 if use_bf16 else jnp.float32
    adj = adj_ref[...].astype(mm_dtype)          # loaded once, reused by every layer

    def gconv(h, w, b):
        support = jnp.dot(h.astype(mm_dtype), w.astype(mm_dtype),
                          preferred_element_type=jnp.float32)
        return jnp.dot(adj, support.astype(mm_dtype),
                       preferred_element_type=jnp.float32) + b

    # --- input layer (dropout is identity in eval mode) ----------------------
    h = jnp.maximum(gconv(x_ref[...], w_in_ref[...], b_in_ref[...]), 0.0)

    # --- middle layers with residual bookkeeping (static, unrolled) ----------
    gather_residue = 1
    r = None
    for i in range(n_mid):
        gather_residue -= 1
        if gather_residue == 0:
            r = h
            gather_residue = residue_layers
        h = jnp.maximum(gconv(h, w_mid_ref[i], b_mid_ref[i]), 0.0)
        if gather_residue == 1:
            h = h + r
    if gather_residue > 1:
        h = h + r

    # --- output layer (no relu) + lane-dense log_softmax over classes --------
    logits = gconv(h, w_out_ref[...], b_out_ref[...])          # (Npad, Cpad)
    col = lax.broadcasted_iota(jnp.int32, logits.shape, 1)
    logits = jnp.where(col < nclass, logits, jnp.float32(-1e30))
    m = jnp.max(logits, axis=1, keepdims=True)
    lse = jnp.log(jnp.sum(jnp.exp(logits - m), axis=1, keepdims=True)) + m
    o_ref[...] = logits - lse


def resk_forward(x, adj, params, nclass, *, residue_layers=1,
                 use_bf16_matmul=False):
    n, nfeat = x.shape
    fpad = params["w_in"].shape[0]
    cpad = params["w_out"].shape[1]
    n_mid = params["w_mid"].shape[0]
    npad = _round_up(n, SUBLANE)

    # zero-pad features to lane width and N to a sublane multiple (host-side, once)
    xp = jnp.zeros((npad, fpad), jnp.float32).at[:n, :nfeat].set(x)
    adjp = jnp.zeros((npad, npad), jnp.float32).at[:n, :n].set(adj)

    args = (xp, adjp, params["w_in"], params["b_in"], params["w_mid"],
            params["b_mid"], params["w_out"], params["b_out"])

    # explicit VMEM budget sized from the actual resident footprint (+ headroom)
    total_bytes = sum(int(a.size) * a.dtype.itemsize for a in args) + npad * cpad * 4
    vmem_limit = int(min(max(4 * total_bytes, 16 * 1024 * 1024), 48 * 1024 * 1024))

    kernel = functools.partial(
        _resk_kernel, n_mid=n_mid, residue_layers=residue_layers,
        nclass=nclass, use_bf16=use_bf16_matmul)

    out = pl.pallas_call(
        kernel,
        out_shape=jax.ShapeDtypeStruct((npad, cpad), jnp.float32),
        in_specs=[pl.BlockSpec(memory_space=VMEM)] * len(args),
        out_specs=pl.BlockSpec(memory_space=VMEM),
        compiler_params=pltpu.CompilerParams(vmem_limit_bytes=vmem_limit),
    )(*args)
    return out[:n, :nclass]


# ----------------------------------------------------------------------------
# Parameter init (mirrors GraphConvolution.reset_parameters: U(-1/sqrt(out), .))
# Weights are stored zero-padded to lane-multiple shapes.
# ----------------------------------------------------------------------------
def init_params(key, nfeat, nhid, nclass, nlayers=3, residue_layers=1):
    if nlayers < 2 + residue_layers:
        raise ValueError("need nlayers >= 2 + residue_layers")
    n_mid = nlayers - 2
    fpad, hpad, cpad = (_round_up(nfeat, LANE), _round_up(nhid, LANE),
                        _round_up(nclass, LANE))
    keys = jax.random.split(key, 2 * nlayers)

    def gc_init(kw, kb, fan_in, fan_out, pad_in, pad_out):
        stdv = 1.0 / float(fan_out) ** 0.5
        w = jax.random.uniform(kw, (fan_in, fan_out), jnp.float32, -stdv, stdv)
        b = jax.random.uniform(kb, (fan_out,), jnp.float32, -stdv, stdv)
        wp = jnp.zeros((pad_in, pad_out), jnp.float32).at[:fan_in, :fan_out].set(w)
        bp = jnp.zeros((1, pad_out), jnp.float32).at[0, :fan_out].set(b)
        return wp, bp

    w_in, b_in = gc_init(keys[0], keys[1], nfeat, nhid, fpad, hpad)
    w_mid, b_mid = [], []
    for i in range(n_mid):
        w, b = gc_init(keys[2 + 2 * i], keys[3 + 2 * i], nhid, nhid, hpad, hpad)
        w_mid.append(w)
        b_mid.append(b[None])                       # (1, 1, hpad)
    w_out, b_out = gc_init(keys[2 * nlayers - 2], keys[2 * nlayers - 1],
                           nhid, nclass, hpad, cpad)
    return {
        "w_in": w_in, "b_in": b_in,
        "w_mid": jnp.stack(w_mid, axis=0),          # (n_mid, hpad, hpad)
        "b_mid": jnp.concatenate(b_mid, axis=0),    # (n_mid, 1, hpad)
        "w_out": w_out, "b_out": b_out,
    }


# ----------------------------------------------------------------------------
# Pure-JAX reference (eval mode) for validation.
# ----------------------------------------------------------------------------
def resk_reference(x, adj, params, nfeat, nhid, nclass, residue_layers):
    w_in = params["w_in"][:nfeat, :nhid]
    b_in = params["b_in"][0, :nhid]
    w_mid = params["w_mid"][:, :nhid, :nhid]
    b_mid = params["b_mid"][:, 0, :nhid]
    w_out = params["w_out"][:nhid, :nclass]
    b_out = params["b_out"][0, :nclass]

    gconv = lambda h, w, b: adj @ (h @ w) + b
    h = jax.nn.relu(gconv(x, w_in, b_in))
    gather_residue = 1
    r = None
    for i in range(w_mid.shape[0]):
        gather_residue -= 1
        if gather_residue == 0:
            r = h
            gather_residue = residue_layers
        h = jax.nn.relu(gconv(h, w_mid[i], b_mid[i]))
        if gather_residue == 1:
            h = h + r
    if gather_residue > 1:
        h = h + r
    return jax.nn.log_softmax(gconv(h, w_out, b_out), axis=1)


if __name__ == "__main__":
    key = jax.random.PRNGKey(0)
    k_x, k_adj, k_p = jax.random.split(key, 3)

    # Small shapes consistent with the module (nlayers=5, residue blocks of 2
    # exercise both the in-loop and the trailing residual add).
    N, nfeat, nhid, nclass = 16, 8, 32, 4
    nlayers, residue_layers = 5, 2

    x = jax.random.normal(k_x, (N, nfeat), jnp.float32)

    # symmetric, row-normalized adjacency with self-loops (typical GCN input)
    a = (jax.random.uniform(k_adj, (N, N)) < 0.3).astype(jnp.float32)
    a = jnp.maximum(a, a.T) + jnp.eye(N, dtype=jnp.float32)
    adj = a / jnp.sum(a, axis=1, keepdims=True)

    params = init_params(k_p, nfeat, nhid, nclass,
                         nlayers=nlayers, residue_layers=residue_layers)

    # use_bf16_matmul=True is a one-line switch for v6e/v7x MXUs; kept f32 here
    # so the result closely matches the f32 reference.
    out = resk_forward(x, adj, params, nclass, residue_layers=residue_layers,
                       use_bf16_matmul=False)
    out = jax.block_until_ready(out)

    assert out.shape == (N, nclass)
    assert bool(jnp.all(jnp.isfinite(out)))
    # rows of log_softmax must exp-sum to 1
    assert bool(jnp.allclose(jnp.sum(jnp.exp(out), axis=1), 1.0, atol=1e-4))

    ref = resk_reference(x, adj, params, nfeat, nhid, nclass, residue_layers)
    assert bool(jnp.max(jnp.abs(out - ref)) < 1e-2)
    print("KERNEL_OK")
</pallas_src>

<mosaic_0001>
module attributes {stable_mosaic.version = 11 : i64} {
  func.func @_resk_kernel(%arg0: memref<16x128xf32, #tpu.memory_space<vmem>>, %arg1: memref<16x16xf32, #tpu.memory_space<vmem>>, %arg2: memref<128x128xf32, #tpu.memory_space<vmem>>, %arg3: memref<1x128xf32, #tpu.memory_space<vmem>>, %arg4: memref<3x128x128xf32, #tpu.memory_space<vmem>>, %arg5: memref<3x1x128xf32, #tpu.memory_space<vmem>>, %arg6: memref<128x128xf32, #tpu.memory_space<vmem>>, %arg7: memref<1x128xf32, #tpu.memory_space<vmem>>, %arg8: memref<16x128xf32, #tpu.memory_space<vmem>>) attributes {dimension_semantics = [], scalar_prefetch = 0 : i64, scratch_operands = 0 : i64, tpu.core_type = #tpu.core_type<tc>} {
    %c0 = arith.constant 0 : index
    %c0_0 = arith.constant 0 : index
    %0 = vector.load %arg1[%c0, %c0_0] : memref<16x16xf32, #tpu.memory_space<vmem>>, vector<16x16xf32>
    %c0_1 = arith.constant 0 : index
    %c0_2 = arith.constant 0 : index
    %1 = vector.load %arg0[%c0_1, %c0_2] : memref<16x128xf32, #tpu.memory_space<vmem>>, vector<16x128xf32>
    %c0_3 = arith.constant 0 : index
    %c0_4 = arith.constant 0 : index
    %2 = vector.load %arg2[%c0_3, %c0_4] : memref<128x128xf32, #tpu.memory_space<vmem>>, vector<128x128xf32>
    %c0_5 = arith.constant 0 : index
    %c0_6 = arith.constant 0 : index
    %3 = vector.load %arg3[%c0_5, %c0_6] : memref<1x128xf32, #tpu.memory_space<vmem>>, vector<1x128xf32>
    %cst = arith.constant dense<0.000000e+00> : vector<16x128xf32>
    %4 = tpu.matmul %1, %2, %cst {dimension_numbers = #tpu.dot_dimension_numbers<[1], [0], [0], [1], [0, 0, 1, 1], [], []>} : vector<16x128xf32>, vector<128x128xf32>, vector<16x128xf32> -> vector<16x128xf32>
    %cst_7 = arith.constant dense<0.000000e+00> : vector<16x128xf32>
    %5 = tpu.matmul %0, %4, %cst_7 {dimension_numbers = #tpu.dot_dimension_numbers<[1], [0], [0], [1], [0, 0, 1, 1], [], []>} : vector<16x16xf32>, vector<16x128xf32>, vector<16x128xf32> -> vector<16x128xf32>
    %6 = vector.broadcast %3 : vector<1x128xf32> to vector<16x128xf32>
    %7 = arith.addf %5, %6 : vector<16x128xf32>
    %cst_8 = arith.constant 0.000000e+00 : f32
    %8 = vector.broadcast %cst_8 : f32 to vector<16x128xf32>
    %9 = arith.maximumf %7, %8 : vector<16x128xf32>
    %c0_9 = arith.constant 0 : index
    %c0_10 = arith.constant 0 : index
    %c0_11 = arith.constant 0 : index
    %10 = vector.load %arg4[%c0_9, %c0_10, %c0_11] : memref<3x128x128xf32, #tpu.memory_space<vmem>>, vector<1x128x128xf32>
    %11 = vector.shape_cast %10 : vector<1x128x128xf32> to vector<128x128xf32>
    %c0_12 = arith.constant 0 : index
    %c0_13 = arith.constant 0 : index
    %c0_14 = arith.constant 0 : index
    %12 = vector.load %arg5[%c0_12, %c0_13, %c0_14] : memref<3x1x128xf32, #tpu.memory_space<vmem>>, vector<1x1x128xf32>
    %13 = vector.shape_cast %12 : vector<1x1x128xf32> to vector<1x128xf32>
    %cst_15 = arith.constant dense<0.000000e+00> : vector<16x128xf32>
    %14 = tpu.matmul %9, %11, %cst_15 {dimension_numbers = #tpu.dot_dimension_numbers<[1], [0], [0], [1], [0, 0, 1, 1], [], []>} : vector<16x128xf32>, vector<128x128xf32>, vector<16x128xf32> -> vector<16x128xf32>
    %cst_16 = arith.constant dense<0.000000e+00> : vector<16x128xf32>
    %15 = tpu.matmul %0, %14, %cst_16 {dimension_numbers = #tpu.dot_dimension_numbers<[1], [0], [0], [1], [0, 0, 1, 1], [], []>} : vector<16x16xf32>, vector<16x128xf32>, vector<16x128xf32> -> vector<16x128xf32>
    %16 = vector.broadcast %13 : vector<1x128xf32> to vector<16x128xf32>
    %17 = arith.addf %15, %16 : vector<16x128xf32>
    %cst_17 = arith.constant 0.000000e+00 : f32
    %18 = vector.broadcast %cst_17 : f32 to vector<16x128xf32>
    %19 = arith.maximumf %17, %18 : vector<16x128xf32>
    %c1 = arith.constant 1 : index
    %c0_18 = arith.constant 0 : index
    %c0_19 = arith.constant 0 : index
    %20 = vector.load %arg4[%c1, %c0_18, %c0_19] : memref<3x128x128xf32, #tpu.memory_space<vmem>>, vector<1x128x128xf32>
    %21 = vector.shape_cast %20 : vector<1x128x128xf32> to vector<128x128xf32>
    %c1_20 = arith.constant 1 : index
    %c0_21 = arith.constant 0 : index
    %c0_22 = arith.constant 0 : index
    %22 = vector.load %arg5[%c1_20, %c0_21, %c0_22] : memref<3x1x128xf32, #tpu.memory_space<vmem>>, vector<1x1x128xf32>
    %23 = vector.shape_cast %22 : vector<1x1x128xf32> to vector<1x128xf32>
    %cst_23 = arith.constant dense<0.000000e+00> : vector<16x128xf32>
    %24 = tpu.matmul %19, %21, %cst_23 {dimension_numbers = #tpu.dot_dimension_numbers<[1], [0], [0], [1], [0, 0, 1, 1], [], []>} : vector<16x128xf32>, vector<128x128xf32>, vector<16x128xf32> -> vector<16x128xf32>
    %cst_24 = arith.constant dense<0.000000e+00> : vector<16x128xf32>
    %25 = tpu.matmul %0, %24, %cst_24 {dimension_numbers = #tpu.dot_dimension_numbers<[1], [0], [0], [1], [0, 0, 1, 1], [], []>} : vector<16x16xf32>, vector<16x128xf32>, vector<16x128xf32> -> vector<16x128xf32>
    %26 = vector.broadcast %23 : vector<1x128xf32> to vector<16x128xf32>
    %27 = arith.addf %25, %26 : vector<16x128xf32>
    %cst_25 = arith.constant 0.000000e+00 : f32
    %28 = vector.broadcast %cst_25 : f32 to vector<16x128xf32>
    %29 = arith.maximumf %27, %28 : vector<16x128xf32>
    %30 = arith.addf %29, %9 : vector<16x128xf32>
    %c2 = arith.constant 2 : index
    %c0_26 = arith.constant 0 : index
    %c0_27 = arith.constant 0 : index
    %31 = vector.load %arg4[%c2, %c0_26, %c0_27] : memref<3x128x128xf32, #tpu.memory_space<vmem>>, vector<1x128x128xf32>
    %32 = vector.shape_cast %31 : vector<1x128x128xf32> to vector<128x128xf32>
    %c2_28 = arith.constant 2 : index
    %c0_29 = arith.constant 0 : index
    %c0_30 = arith.constant 0 : index
    %33 = vector.load %arg5[%c2_28, %c0_29, %c0_30] : memref<3x1x128xf32, #tpu.memory_space<vmem>>, vector<1x1x128xf32>
    %34 = vector.shape_cast %33 : vector<1x1x128xf32> to vector<1x128xf32>
    %cst_31 = arith.constant dense<0.000000e+00> : vector<16x128xf32>
    %35 = tpu.matmul %30, %32, %cst_31 {dimension_numbers = #tpu.dot_dimension_numbers<[1], [0], [0], [1], [0, 0, 1, 1], [], []>} : vector<16x128xf32>, vector<128x128xf32>, vector<16x128xf32> -> vector<16x128xf32>
    %cst_32 = arith.constant dense<0.000000e+00> : vector<16x128xf32>
    %36 = tpu.matmul %0, %35, %cst_32 {dimension_numbers = #tpu.dot_dimension_numbers<[1], [0], [0], [1], [0, 0, 1, 1], [], []>} : vector<16x16xf32>, vector<16x128xf32>, vector<16x128xf32> -> vector<16x128xf32>
    %37 = vector.broadcast %34 : vector<1x128xf32> to vector<16x128xf32>
    %38 = arith.addf %36, %37 : vector<16x128xf32>
    %cst_33 = arith.constant 0.000000e+00 : f32
    %39 = vector.broadcast %cst_33 : f32 to vector<16x128xf32>
    %40 = arith.maximumf %38, %39 : vector<16x128xf32>
    %41 = arith.addf %40, %30 : vector<16x128xf32>
    %c0_34 = arith.constant 0 : index
    %c0_35 = arith.constant 0 : index
    %42 = vector.load %arg6[%c0_34, %c0_35] : memref<128x128xf32, #tpu.memory_space<vmem>>, vector<128x128xf32>
    %c0_36 = arith.constant 0 : index
    %c0_37 = arith.constant 0 : index
    %43 = vector.load %arg7[%c0_36, %c0_37] : memref<1x128xf32, #tpu.memory_space<vmem>>, vector<1x128xf32>
    %cst_38 = arith.constant dense<0.000000e+00> : vector<16x128xf32>
    %44 = tpu.matmul %41, %42, %cst_38 {dimension_numbers = #tpu.dot_dimension_numbers<[1], [0], [0], [1], [0, 0, 1, 1], [], []>} : vector<16x128xf32>, vector<128x128xf32>, vector<16x128xf32> -> vector<16x128xf32>
    %cst_39 = arith.constant dense<0.000000e+00> : vector<16x128xf32>
    %45 = tpu.matmul %0, %44, %cst_39 {dimension_numbers = #tpu.dot_dimension_numbers<[1], [0], [0], [1], [0, 0, 1, 1], [], []>} : vector<16x16xf32>, vector<16x128xf32>, vector<16x128xf32> -> vector<16x128xf32>
    %46 = vector.broadcast %43 : vector<1x128xf32> to vector<16x128xf32>
    %47 = arith.addf %45, %46 : vector<16x128xf32>
    %48 = tpu.iota {dimensions = array<i32: 1>} : vector<16x128xi32>
    %c4_i32 = arith.constant 4 : i32
    %49 = vector.broadcast %c4_i32 : i32 to vector<16x128xi32>
    %50 = arith.cmpi slt, %48, %49 : vector<16x128xi32>
    %cst_40 = arith.constant -1.000000e+30 : f32
    %51 = vector.broadcast %cst_40 : f32 to vector<16x128xf32>
    %52 = arith.select %50, %47, %51 : vector<16x128xi1>, vector<16x128xf32>
    %cst_41 = arith.constant dense<0xFF800000> : vector<16xf32>
    %53 = vector.multi_reduction <maximumf>, %52, %cst_41 [1] : vector<16x128xf32> to vector<16xf32>
    %54 = vector.shape_cast %53 : vector<16xf32> to vector<16x1xf32>
    %55 = vector.broadcast %54 : vector<16x1xf32> to vector<16x128xf32>
    %56 = arith.subf %52, %55 : vector<16x128xf32>
    %57 = math.exp %56 : vector<16x128xf32>
    %cst_42 = arith.constant dense<0.000000e+00> : vector<16xf32>
    %58 = vector.multi_reduction <add>, %57, %cst_42 [1] : vector<16x128xf32> to vector<16xf32>
    %59 = vector.shape_cast %58 : vector<16xf32> to vector<16x1xf32>
    %60 = math.log %59 : vector<16x1xf32>
    %61 = arith.addf %60, %54 : vector<16x1xf32>
    %62 = vector.broadcast %61 : vector<16x1xf32> to vector<16x128xf32>
    %63 = arith.subf %52, %62 : vector<16x128xf32>
    %c0_43 = arith.constant 0 : index
    %c0_44 = arith.constant 0 : index
    %64 = vector.load %arg8[%c0_43, %c0_44] : memref<16x128xf32, #tpu.memory_space<vmem>>, vector<16x128xf32>
    tpu.vector_store %arg8[%c0_43, %c0_44], %63 {strides = array<i32>} : memref<16x128xf32, #tpu.memory_space<vmem>>, vector<16x128xf32>,
    return
  }
}

</mosaic_0001>

<llo_original>
// kernel: tpu_custom_call.1
$region0: #{tpu_custom_call.1}
  #allocation0 [shape = 'u32[]', space=smem, size = 0x4, offset = 0x4, fixed_abs, tag = 'smem constant byte address 0x4 - core index']
  #allocation1 [shape = 'u32[72,128]{1,0:T(1,128)}', space=vmem, size = 0x9000, scoped, tag = 'internal scratch']
  %s0 = inlined_call_operand.hbm [shape: f32[16,128], index: 0, kind: input, shape index: {}]
  %s1 = inlined_call_operand.hbm [shape: f32[16,16], index: 1, kind: input, shape index: {}]
  %s2 = inlined_call_operand.hbm [shape: f32[128,128], index: 2, kind: input, shape index: {}]
  %s3 = inlined_call_operand.vmem [shape: f32[1,128], index: 3, kind: input, shape index: {}]
  %s4 = inlined_call_operand.hbm [shape: f32[3,128,128], index: 4, kind: input, shape index: {}]
  %s5 = inlined_call_operand.vmem [shape: f32[3,1,128], index: 5, kind: input, shape index: {}]
  %s6 = inlined_call_operand.hbm [shape: f32[128,128], index: 6, kind: input, shape index: {}]
  %s7 = inlined_call_operand.vmem [shape: f32[1,128], index: 7, kind: input, shape index: {}]
  %s8 = inlined_call_operand.hbm [shape: f32[16,128], index: 8, kind: output, shape index: {}]
  %s9 = sld [smem:[#allocation0]]
  $region62: #{tpu_custom_call.1} parent=0
    _
  %s11 = ssub.s32 1, %s9
  %s12 = scalar_select 0, %s11, %s9
  $region1: #{tpu_custom_call.1} parent=0
    #allocation2 [shape = 'u8[8192]{0}', space=vmem, size = 0x2000, scoped, tag = 'input window, operand 0, single buffered']
    #allocation3 [shape = 's32[1]{0}', space=sflag, size = 0x4, scoped, tag = 'scoped memory for tpu_custom_call.1']
    #allocation4 [shape = 's32[1]{0}', space=sflag, size = 0x4, scoped, tag = 'scoped memory for tpu_custom_call.1']
    #allocation5 [shape = 'u8[8192]{0}', space=vmem, size = 0x2000, scoped, tag = 'input window, operand 1, single buffered']
    #allocation6 [shape = 's32[1]{0}', space=sflag, size = 0x4, scoped, tag = 'scoped memory for tpu_custom_call.1']
    #allocation7 [shape = 'u8[65536]{0}', space=vmem, size = 0x10000, scoped, tag = 'input window, operand 2, single buffered']
    #allocation8 [shape = 'u8[196608]{0}', space=vmem, size = 0x30000, scoped, tag = 'input window, operand 4, single buffered']
    #allocation9 [shape = 's32[1]{0}', space=sflag, size = 0x4, scoped, tag = 'scoped memory for tpu_custom_call.1']
    #allocation10 [shape = 'u8[65536]{0}', space=vmem, size = 0x10000, scoped, tag = 'input window, operand 6, single buffered']
    #allocation11 [shape = 'u8[8192]{0}', space=vmem, size = 0x2000, scoped, tag = 'output window, operand 0, single buffered']
    %13 = vsyncpa [#allocation3], 0
    %14 = vsyncpa [#allocation6], 0
    %15 = vsyncpa [#allocation9], 0
    %16 = vsyncpa [#allocation4], 0
    // Predicated region
    $region2: #{tpu_custom_call.1} parent=1 // pred_check
      _
    $region3: #{tpu_custom_call.1} parent=1 // pred_check_branch
      %18 = sbr.rel (0) target = $region5
    $region4: #{tpu_custom_call.1} parent=1 // pred_region
      %20 = vsyncadd [#allocation3], 0
      %s21 = sshll.u32 %s0, 4
      %s22 = int_to_ptr.hbm [resolvable:$true] %s21
      %s23 = sshll.u32 [#allocation2], 4
      %s24 = int_to_ptr.vmem [resolvable:$true] %s23
      %29 = dma.hbm_to_vmem [thread:$0]  %s22, 256, %s24, [#allocation3], 128, 128, 8
    $region5: #{tpu_custom_call.1} parent=1 // pred_fallthru
      _
    // Predicated region
    $region6: #{tpu_custom_call.1} parent=1 // pred_check
      _
    $region7: #{tpu_custom_call.1} parent=1 // pred_check_branch
      %31 = sbr.rel (0) target = $region9
    $region8: #{tpu_custom_call.1} parent=1 // pred_region
      %33 = vsyncadd [#allocation6], 0
      %s34 = sshll.u32 %s1, 4
      %s35 = int_to_ptr.hbm [resolvable:$true] %s34
      %s36 = sshll.u32 [#allocation5], 4
      %s37 = int_to_ptr.vmem [resolvable:$true] %s36
      %42 = dma.hbm_to_vmem [thread:$0]  %s35, 256, %s37, [#allocation6], 128, 128, 8
    $region9: #{tpu_custom_call.1} parent=1 // pred_fallthru
      _
    // Predicated region
    $region10: #{tpu_custom_call.1} parent=1 // pred_check
      _
    $region11: #{tpu_custom_call.1} parent=1 // pred_check_branch
      %44 = sbr.rel (0) target = $region13
    $region12: #{tpu_custom_call.1} parent=1 // pred_region
      %46 = vsyncadd [#allocation6], 0
      %s47 = sshll.u32 %s2, 4
      %s48 = int_to_ptr.hbm [resolvable:$true] %s47
      %s49 = sshll.u32 [#allocation7], 4
      %s50 = int_to_ptr.vmem [resolvable:$true] %s49
      %55 = dma.hbm_to_vmem [thread:$0]  %s48, 2048, %s50, [#allocation6], 128, 128, 8
    $region13: #{tpu_custom_call.1} parent=1 // pred_fallthru
      _
    // Predicated region
    $region14: #{tpu_custom_call.1} parent=1 // pred_check
      _
    $region15: #{tpu_custom_call.1} parent=1 // pred_check_branch
      %57 = sbr.rel (0) target = $region17
    $region16: #{tpu_custom_call.1} parent=1 // pred_region
      _
    $region17: #{tpu_custom_call.1} parent=1 // pred_fallthru
      _
    // Predicated region
    $region18: #{tpu_custom_call.1} parent=1 // pred_check
      _
    $region19: #{tpu_custom_call.1} parent=1 // pred_check_branch
      %59 = sbr.rel (0) target = $region21
    $region20: #{tpu_custom_call.1} parent=1 // pred_region
      %61 = vsyncadd [#allocation9], 0
      %s62 = sshll.u32 %s4, 4
      %s63 = int_to_ptr.hbm [resolvable:$true] %s62
      %s64 = sshll.u32 [#allocation8], 4
      %s65 = int_to_ptr.vmem [resolvable:$true] %s64
      %70 = dma.hbm_to_vmem [thread:$0]  %s63, 6144, %s65, [#allocation9], 128, 128, 8
    $region21: #{tpu_custom_call.1} parent=1 // pred_fallthru
      _
    // Predicated region
    $region22: #{tpu_custom_call.1} parent=1 // pred_check
      _
    $region23: #{tpu_custom_call.1} parent=1 // pred_check_branch
      %72 = sbr.rel (0) target = $region25
    $region24: #{tpu_custom_call.1} parent=1 // pred_region
      _
    $region25: #{tpu_custom_call.1} parent=1 // pred_fallthru
      _
    // Predicated region
    $region26: #{tpu_custom_call.1} parent=1 // pred_check
      _
    $region27: #{tpu_custom_call.1} parent=1 // pred_check_branch
      %74 = sbr.rel (0) target = $region29
    $region28: #{tpu_custom_call.1} parent=1 // pred_region
      %76 = vsyncadd [#allocation9], 0
      %s77 = sshll.u32 %s6, 4
      %s78 = int_to_ptr.hbm [resolvable:$true] %s77
      %s79 = sshll.u32 [#allocation10], 4
      %s80 = int_to_ptr.vmem [resolvable:$true] %s79
      %85 = dma.hbm_to_vmem [thread:$0]  %s78, 2048, %s80, [#allocation9], 128, 128, 8
    $region29: #{tpu_custom_call.1} parent=1 // pred_fallthru
      _
    // Predicated region
    $region30: #{tpu_custom_call.1} parent=1 // pred_check
      _
    $region31: #{tpu_custom_call.1} parent=1 // pred_check_branch
      %87 = sbr.rel (0) target = $region33
    $region32: #{tpu_custom_call.1} parent=1 // pred_region
      _
    $region33: #{tpu_custom_call.1} parent=1 // pred_fallthru
      _
    // Predicated region
    $region34: #{tpu_custom_call.1} parent=1 // pred_check
      _
    $region35: #{tpu_custom_call.1} parent=1 // pred_check_branch
      %89 = sbr.rel (0) target = $region37
    $region36: #{tpu_custom_call.1} parent=1 // pred_region
      %91 = dma.done [#allocation3], 256
    $region37: #{tpu_custom_call.1} parent=1 // pred_fallthru
      _
    // Predicated region
    $region38: #{tpu_custom_call.1} parent=1 // pred_check
      _
    $region39: #{tpu_custom_call.1} parent=1 // pred_check_branch
      %93 = sbr.rel (0) target = $region41
    $region40: #{tpu_custom_call.1} parent=1 // pred_region
      %95 = dma.done [#allocation6], 256
    $region41: #{tpu_custom_call.1} parent=1 // pred_fallthru
      _
    // Predicated region
    $region42: #{tpu_custom_call.1} parent=1 // pred_check
      _
    $region43: #{tpu_custom_call.1} parent=1 // pred_check_branch
      %97 = sbr.rel (0) target = $region45
    $region44: #{tpu_custom_call.1} parent=1 // pred_region
      %99 = dma.done [#allocation6], 2048
    $region45: #{tpu_custom_call.1} parent=1 // pred_fallthru
      _
    // Predicated region
    $region46: #{tpu_custom_call.1} parent=1 // pred_check
      _
    $region47: #{tpu_custom_call.1} parent=1 // pred_check_branch
      %101 = sbr.rel (0) target = $region49
    $region48: #{tpu_custom_call.1} parent=1 // pred_region
      %103 = dma.done [#allocation9], 6144
    $region49: #{tpu_custom_call.1} parent=1 // pred_fallthru
      _
    // Predicated region
    $region50: #{tpu_custom_call.1} parent=1 // pred_check
      _
    $region51: #{tpu_custom_call.1} parent=1 // pred_check_branch
      %105 = sbr.rel (0) target = $region53
    $region52: #{tpu_custom_call.1} parent=1 // pred_region
      %107 = dma.done [#allocation9], 2048
    $region53: #{tpu_custom_call.1} parent=1 // pred_fallthru
      _
    %v108 = vld [vmem:[#allocation5] sm:$0xff]
    %v109 = vld [vmem:[#allocation5 + $0x8] sm:$0xff]
    %v110 = vld [vmem:[#allocation2] sm:$0xff]
    %v111 = vld [vmem:[#allocation2 + $0x8] sm:$0xff]
    %v112 = vld [vmem:[#allocation7] sm:$0xff]
    %v113 = vld [vmem:[#allocation7 + $0x8] sm:$0xff]
    %v114 = vld [vmem:[#allocation7 + $0x10] sm:$0xff]
    %v115 = vld [vmem:[#allocation7 + $0x18] sm:$0xff]
    %v116 = vld [vmem:[#allocation7 + $0x20] sm:$0xff]
    %v117 = vld [vmem:[#allocation7 + $0x28] sm:$0xff]
    %v118 = vld [vmem:[#allocation7 + $0x30] sm:$0xff]
    %v119 = vld [vmem:[#allocation7 + $0x38] sm:$0xff]
    %v120 = vld [vmem:[#allocation7 + $0x40] sm:$0xff]
    %v121 = vld [vmem:[#allocation7 + $0x48] sm:$0xff]
    %v122 = vld [vmem:[#allocation7 + $0x50] sm:$0xff]
    %v123 = vld [vmem:[#allocation7 + $0x58] sm:$0xff]
    %v124 = vld [vmem:[#allocation7 + $0x60] sm:$0xff]
    %v125 = vld [vmem:[#allocation7 + $0x68] sm:$0xff]
    %v126 = vld [vmem:[#allocation7 + $0x70] sm:$0xff]
    %v127 = vld [vmem:[#allocation7 + $0x78] sm:$0xff]
    %v128 = vld [vmem:[%s3] sm:$0x1]
    %129 = vmatpush.msra.mxu0 %v127
    %130 = vmatpush.msra.mxu0 %v126
    %131 = vmatpush.msra.mxu0 %v125
    %132 = vmatpush.msra.mxu0 %v124
    %133 = vmatpush.msra.mxu0 %v123
    %134 = vmatpush.msra.mxu0 %v122
    %135 = vmatpush.msra.mxu0 %v121
    %136 = vmatpush.msra.mxu0 %v120
    %137 = vmatpush.msra.mxu0 %v119
    %138 = vmatpush.msra.mxu0 %v118
    %139 = vmatpush.msra.mxu0 %v117
    %140 = vmatpush.msra.mxu0 %v116
    %141 = vmatpush.msra.mxu0 %v115
    %142 = vmatpush.msra.mxu0 %v114
    %143 = vmatpush.msra.mxu0 %v113
    %144 = vmatpush.msra.mxu0 %v112
    %145 = vmatmul.f32.gmra.mxu0 %v110
    %v146 = vpop.f32.mrf.mxu0
    %v147 = vadd.f32 0.0, %v146
    %148 = vmatmul.f32.gmra.mxu0 %v111
    %v149 = vpop.f32.mrf.mxu0
    %v150 = vadd.f32 0.0, %v149
    %151 = vdwg.mxu0
    %v153 = vperm.slane %v128, 0
    %vm155 = vcmask 130048
    %v157 = vsel %vm155, %v108, 0
    %v160 = vsel %vm155, %v109, 0
    %162 = vmatpush.msra.mxu0 0.0
    %163 = vmatpush.msra.mxu0 0.0
    %164 = vmatpush.msra.mxu0 0.0
    %165 = vmatpush.msra.mxu0 0.0
    %166 = vmatpush.msra.mxu0 0.0
    %167 = vmatpush.msra.mxu0 0.0
    %168 = vmatpush.msra.mxu0 0.0
    %169 = vmatpush.msra.mxu0 0.0
    %170 = vmatpush.msra.mxu0 0.0
    %171 = vmatpush.msra.mxu0 0.0
    %172 = vmatpush.msra.mxu0 0.0
    %173 = vmatpush.msra.mxu0 0.0
    %174 = vmatpush.msra.mxu0 0.0
    %175 = vmatpush.msra.mxu0 0.0
    %176 = vmatpush.msra.mxu0 %v150
    %177 = vmatpush.msra.mxu0 %v147
    %178 = vmatmul.f32.gmra.mxu0 %v157
    %v179 = vpop.f32.mrf.mxu0
    %v180 = vadd.f32 %v153, %v179
    %181 = vmatmul.f32.gmra.mxu0 %v160
    %v182 = vpop.f32.mrf.mxu0
    %v183 = vadd.f32 %v153, %v182
    %184 = vdwg.mxu0
    %v185 = vmax.f32 %v180, 0.0
    %v186 = vmax.f32 %v183, 0.0
    %v187 = vld [vmem:[#allocation8] sm:$0xff]
    %v188 = vld [vmem:[#allocation8 + $0x8] sm:$0xff]
    %v189 = vld [vmem:[#allocation8 + $0x10] sm:$0xff]
    %v190 = vld [vmem:[#allocation8 + $0x18] sm:$0xff]
    %v191 = vld [vmem:[#allocation8 + $0x20] sm:$0xff]
    %v192 = vld [vmem:[#allocation8 + $0x28] sm:$0xff]
    %v193 = vld [vmem:[#allocation8 + $0x30] sm:$0xff]
    %v194 = vld [vmem:[#allocation8 + $0x38] sm:$0xff]
    %v195 = vld [vmem:[#allocation8 + $0x40] sm:$0xff]
    %v196 = vld [vmem:[#allocation8 + $0x48] sm:$0xff]
    %v197 = vld [vmem:[#allocation8 + $0x50] sm:$0xff]
    %v198 = vld [vmem:[#allocation8 + $0x58] sm:$0xff]
    %v199 = vld [vmem:[#allocation8 + $0x60] sm:$0xff]
    %v200 = vld [vmem:[#allocation8 + $0x68] sm:$0xff]
    %v201 = vld [vmem:[#allocation8 + $0x70] sm:$0xff]
    %v202 = vld [vmem:[#allocation8 + $0x78] sm:$0xff]
    %v203 = vld [vmem:[%s5] sm:$0x1]
    %204 = vmatpush.msra.mxu0 %v202
    %205 = vmatpush.msra.mxu0 %v201
    %206 = vmatpush.msra.mxu0 %v200
    %207 = vmatpush.msra.mxu0 %v199
    %208 = vmatpush.msra.mxu0 %v198
    %209 = vmatpush.msra.mxu0 %v197
    %210 = vmatpush.msra.mxu0 %v196
    %211 = vmatpush.msra.mxu0 %v195
    %212 = vmatpush.msra.mxu0 %v194
    %213 = vmatpush.msra.mxu0 %v193
    %214 = vmatpush.msra.mxu0 %v192
    %215 = vmatpush.msra.mxu0 %v191
    %216 = vmatpush.msra.mxu0 %v190
    %217 = vmatpush.msra.mxu0 %v189
    %218 = vmatpush.msra.mxu0 %v188
    %219 = vmatpush.msra.mxu0 %v187
    %220 = vmatmul.f32.gmra.mxu0 %v185
    %v221 = vpop.f32.mrf.mxu0
    %v222 = vadd.f32 0.0, %v221
    %223 = vmatmul.f32.gmra.mxu0 %v186
    %v224 = vpop.f32.mrf.mxu0
    %v225 = vadd.f32 0.0, %v224
    %226 = vdwg.mxu0
    %v228 = vperm.slane %v203, 0
    %230 = vmatpush.msra.mxu0 0.0
    %231 = vmatpush.msra.mxu0 0.0
    %232 = vmatpush.msra.mxu0 0.0
    %233 = vmatpush.msra.mxu0 0.0
    %234 = vmatpush.msra.mxu0 0.0
    %235 = vmatpush.msra.mxu0 0.0
    %236 = vmatpush.msra.mxu0 0.0
    %237 = vmatpush.msra.mxu0 0.0
    %238 = vmatpush.msra.mxu0 0.0
    %239 = vmatpush.msra.mxu0 0.0
    %240 = vmatpush.msra.mxu0 0.0
    %241 = vmatpush.msra.mxu0 0.0
    %242 = vmatpush.msra.mxu0 0.0
    %243 = vmatpush.msra.mxu0 0.0
    %244 = vmatpush.msra.mxu0 %v225
    %245 = vmatpush.msra.mxu0 %v222
    %246 = vmatmul.f32.gmra.mxu0 %v157
    %v247 = vpop.f32.mrf.mxu0
    %v248 = vadd.f32 %v228, %v247
    %249 = vmatmul.f32.gmra.mxu0 %v160
    %v250 = vpop.f32.mrf.mxu0
    %v251 = vadd.f32 %v228, %v250
    %252 = vdwg.mxu0
    %v253 = vmax.f32 %v248, 0.0
    %v254 = vmax.f32 %v251, 0.0
    %s255 = scalar_lea.vmem [#allocation8], 128
    %v256 = vld [vmem:[%s255] sm:$0xff]
    %v257 = vld [vmem:[%s255 + $0x8] sm:$0xff]
    %v258 = vld [vmem:[%s255 + $0x10] sm:$0xff]
    %v259 = vld [vmem:[%s255 + $0x18] sm:$0xff]
    %v260 = vld [vmem:[%s255 + $0x20] sm:$0xff]
    %v261 = vld [vmem:[%s255 + $0x28] sm:$0xff]
    %v262 = vld [vmem:[%s255 + $0x30] sm:$0xff]
    %v263 = vld [vmem:[%s255 + $0x38] sm:$0xff]
    %v264 = vld [vmem:[%s255 + $0x40] sm:$0xff]
    %v265 = vld [vmem:[%s255 + $0x48] sm:$0xff]
    %v266 = vld [vmem:[%s255 + $0x50] sm:$0xff]
    %v267 = vld [vmem:[%s255 + $0x58] sm:$0xff]
    %v268 = vld [vmem:[%s255 + $0x60] sm:$0xff]
    %v269 = vld [vmem:[%s255 + $0x68] sm:$0xff]
    %v270 = vld [vmem:[%s255 + $0x70] sm:$0xff]
    %v271 = vld [vmem:[%s255 + $0x78] sm:$0xff]
    %s272 = scalar_lea.vmem %s5, 1
    %v273 = vld [vmem:[%s272] sm:$0x1]
    %274 = vmatpush.msra.mxu0 %v271
    %275 = vmatpush.msra.mxu0 %v270
    %276 = vmatpush.msra.mxu0 %v269
    %277 = vmatpush.msra.mxu0 %v268
    %278 = vmatpush.msra.mxu0 %v267
    %279 = vmatpush.msra.mxu0 %v266
    %280 = vmatpush.msra.mxu0 %v265
    %281 = vmatpush.msra.mxu0 %v264
    %282 = vmatpush.msra.mxu0 %v263
    %283 = vmatpush.msra.mxu0 %v262
    %284 = vmatpush.msra.mxu0 %v261
    %285 = vmatpush.msra.mxu0 %v260
    %286 = vmatpush.msra.mxu0 %v259
    %287 = vmatpush.msra.mxu0 %v258
    %288 = vmatpush.msra.mxu0 %v257
    %289 = vmatpush.msra.mxu0 %v256
    %290 = vmatmul.f32.gmra.mxu0 %v253
    %v291 = vpop.f32.mrf.mxu0
    %v292 = vadd.f32 0.0, %v291
    %293 = vmatmul.f32.gmra.mxu0 %v254
    %v294 = vpop.f32.mrf.mxu0
    %v295 = vadd.f32 0.0, %v294
    %296 = vdwg.mxu0
    %v298 = vperm.slane %v273, 0
    %300 = vmatpush.msra.mxu0 0.0
    %301 = vmatpush.msra.mxu0 0.0
    %302 = vmatpush.msra.mxu0 0.0
    %303 = vmatpush.msra.mxu0 0.0
    %304 = vmatpush.msra.mxu0 0.0
    %305 = vmatpush.msra.mxu0 0.0
    %306 = vmatpush.msra.mxu0 0.0
    %307 = vmatpush.msra.mxu0 0.0
    %308 = vmatpush.msra.mxu0 0.0
    %309 = vmatpush.msra.mxu0 0.0
    %310 = vmatpush.msra.mxu0 0.0
    %311 = vmatpush.msra.mxu0 0.0
    %312 = vmatpush.msra.mxu0 0.0
    %313 = vmatpush.msra.mxu0 0.0
    %314 = vmatpush.msra.mxu0 %v295
    %315 = vmatpush.msra.mxu0 %v292
    %316 = vmatmul.f32.gmra.mxu0 %v157
    %v317 = vpop.f32.mrf.mxu0
    %v318 = vadd.f32 %v298, %v317
    %319 = vmatmul.f32.gmra.mxu0 %v160
    %v320 = vpop.f32.mrf.mxu0
    %v321 = vadd.f32 %v298, %v320
    %322 = vdwg.mxu0
    %v323 = vmax.f32 %v318, 0.0
    %v324 = vmax.f32 %v321, 0.0
    %v325 = vadd.f32 %v323, %v185
    %v326 = vadd.f32 %v324, %v186
    %s327 = scalar_lea.vmem [#allocation8], 256
    %v328 = vld [vmem:[%s327] sm:$0xff]
    %v329 = vld [vmem:[%s327 + $0x8] sm:$0xff]
    %v330 = vld [vmem:[%s327 + $0x10] sm:$0xff]
    %v331 = vld [vmem:[%s327 + $0x18] sm:$0xff]
    %v332 = vld [vmem:[%s327 + $0x20] sm:$0xff]
    %v333 = vld [vmem:[%s327 + $0x28] sm:$0xff]
    %v334 = vld [vmem:[%s327 + $0x30] sm:$0xff]
    %v335 = vld [vmem:[%s327 + $0x38] sm:$0xff]
    %v336 = vld [vmem:[%s327 + $0x40] sm:$0xff]
    %v337 = vld [vmem:[%s327 + $0x48] sm:$0xff]
    %v338 = vld [vmem:[%s327 + $0x50] sm:$0xff]
    %v339 = vld [vmem:[%s327 + $0x58] sm:$0xff]
    %v340 = vld [vmem:[%s327 + $0x60] sm:$0xff]
    %v341 = vld [vmem:[%s327 + $0x68] sm:$0xff]
    %v342 = vld [vmem:[%s327 + $0x70] sm:$0xff]
    %v343 = vld [vmem:[%s327 + $0x78] sm:$0xff]
    %s344 = scalar_lea.vmem %s5, 2
    %v345 = vld [vmem:[%s344] sm:$0x1]
    %346 = vmatpush.msra.mxu0 %v343
    %347 = vmatpush.msra.mxu0 %v342
    %348 = vmatpush.msra.mxu0 %v341
    %349 = vmatpush.msra.mxu0 %v340
    %350 = vmatpush.msra.mxu0 %v339
    %351 = vmatpush.msra.mxu0 %v338
    %352 = vmatpush.msra.mxu0 %v337
    %353 = vmatpush.msra.mxu0 %v336
    %354 = vmatpush.msra.mxu0 %v335
    %355 = vmatpush.msra.mxu0 %v334
    %356 = vmatpush.msra.mxu0 %v333
    %357 = vmatpush.msra.mxu0 %v332
    %358 = vmatpush.msra.mxu0 %v331
    %359 = vmatpush.msra.mxu0 %v330
    %360 = vmatpush.msra.mxu0 %v329
    %361 = vmatpush.msra.mxu0 %v328
    %362 = vmatmul.f32.gmra.mxu0 %v325
    %v363 = vpop.f32.mrf.mxu0
    %v364 = vadd.f32 0.0, %v363
    %365 = vmatmul.f32.gmra.mxu0 %v326
    %v366 = vpop.f32.mrf.mxu0
    %v367 = vadd.f32 0.0, %v366
    %368 = vdwg.mxu0
    %v370 = vperm.slane %v345, 0
    %372 = vmatpush.msra.mxu0 0.0
    %373 = vmatpush.msra.mxu0 0.0
    %374 = vmatpush.msra.mxu0 0.0
    %375 = vmatpush.msra.mxu0 0.0
    %376 = vmatpush.msra.mxu0 0.0
    %377 = vmatpush.msra.mxu0 0.0
    %378 = vmatpush.msra.mxu0 0.0
    %379 = vmatpush.msra.mxu0 0.0
    %380 = vmatpush.msra.mxu0 0.0
    %381 = vmatpush.msra.mxu0 0.0
    %382 = vmatpush.msra.mxu0 0.0
    %383 = vmatpush.msra.mxu0 0.0
    %384 = vmatpush.msra.mxu0 0.0
    %385 = vmatpush.msra.mxu0 0.0
    %386 = vmatpush.msra.mxu0 %v367
    %387 = vmatpush.msra.mxu0 %v364
    %388 = vmatmul.f32.gmra.mxu0 %v157
    %v389 = vpop.f32.mrf.mxu0
    %v390 = vadd.f32 %v370, %v389
    %391 = vmatmul.f32.gmra.mxu0 %v160
    %v392 = vpop.f32.mrf.mxu0
    %v393 = vadd.f32 %v370, %v392
    %394 = vdwg.mxu0
    %v395 = vmax.f32 %v390, 0.0
    %v396 = vmax.f32 %v393, 0.0
    %v397 = vadd.f32 %v395, %v325
    %v398 = vadd.f32 %v396, %v326
    %v399 = vld [vmem:[#allocation10] sm:$0xff]
    %v400 = vld [vmem:[#allocation10 + $0x8] sm:$0xff]
    %v401 = vld [vmem:[#allocation10 + $0x10] sm:$0xff]
    %v402 = vld [vmem:[#allocation10 + $0x18] sm:$0xff]
    %v403 = vld [vmem:[#allocation10 + $0x20] sm:$0xff]
    %v404 = vld [vmem:[#allocation10 + $0x28] sm:$0xff]
    %v405 = vld [vmem:[#allocation10 + $0x30] sm:$0xff]
    %v406 = vld [vmem:[#allocation10 + $0x38] sm:$0xff]
    %v407 = vld [vmem:[#allocation10 + $0x40] sm:$0xff]
    %v408 = vld [vmem:[#allocation10 + $0x48] sm:$0xff]
    %v409 = vld [vmem:[#allocation10 + $0x50] sm:$0xff]
    %v410 = vld [vmem:[#allocation10 + $0x58] sm:$0xff]
    %v411 = vld [vmem:[#allocation10 + $0x60] sm:$0xff]
    %v412 = vld [vmem:[#allocation10 + $0x68] sm:$0xff]
    %v413 = vld [vmem:[#allocation10 + $0x70] sm:$0xff]
    %v414 = vld [vmem:[#allocation10 + $0x78] sm:$0xff]
    %v415 = vld [vmem:[%s7] sm:$0x1]
    %416 = vmatpush.msra.mxu0 %v414
    %417 = vmatpush.msra.mxu0 %v413
    %418 = vmatpush.msra.mxu0 %v412
    %419 = vmatpush.msra.mxu0 %v411
    %420 = vmatpush.msra.mxu0 %v410
    %421 = vmatpush.msra.mxu0 %v409
    %422 = vmatpush.msra.mxu0 %v408
    %423 = vmatpush.msra.mxu0 %v407
    %424 = vmatpush.msra.mxu0 %v406
    %425 = vmatpush.msra.mxu0 %v405
    %426 = vmatpush.msra.mxu0 %v404
    %427 = vmatpush.msra.mxu0 %v403
    %428 = vmatpush.msra.mxu0 %v402
    %429 = vmatpush.msra.mxu0 %v401
    %430 = vmatpush.msra.mxu0 %v400
    %431 = vmatpush.msra.mxu0 %v399
    %432 = vmatmul.f32.gmra.mxu0 %v397
    %v433 = vpop.f32.mrf.mxu0
    %v434 = vadd.f32 0.0, %v433
    %435 = vmatmul.f32.gmra.mxu0 %v398
    %v436 = vpop.f32.mrf.mxu0
    %v437 = vadd.f32 0.0, %v436
    %438 = vdwg.mxu0
    %v440 = vperm.slane %v415, 0
    %442 = vmatpush.msra.mxu0 0.0
    %443 = vmatpush.msra.mxu0 0.0
    %444 = vmatpush.msra.mxu0 0.0
    %445 = vmatpush.msra.mxu0 0.0
    %446 = vmatpush.msra.mxu0 0.0
    %447 = vmatpush.msra.mxu0 0.0
    %448 = vmatpush.msra.mxu0 0.0
    %449 = vmatpush.msra.mxu0 0.0
    %450 = vmatpush.msra.mxu0 0.0
    %451 = vmatpush.msra.mxu0 0.0
    %452 = vmatpush.msra.mxu0 0.0
    %453 = vmatpush.msra.mxu0 0.0
    %454 = vmatpush.msra.mxu0 0.0
    %455 = vmatpush.msra.mxu0 0.0
    %456 = vmatpush.msra.mxu0 %v437
    %457 = vmatpush.msra.mxu0 %v434
    %458 = vmatmul.f32.gmra.mxu0 %v157
    %v459 = vpop.f32.mrf.mxu0
    %v460 = vadd.f32 %v440, %v459
    %461 = vmatmul.f32.gmra.mxu0 %v160
    %v462 = vpop.f32.mrf.mxu0
    %v463 = vadd.f32 %v440, %v462
    %464 = vdwg.mxu0
    %v465 = vlaneseq
    %v466 = vand.u32 %v465, 127
    %vm467 = vcmp.lt.s32.totalorder %v466, 4
    %v468 = vsel %vm467, %v460, -1e+30
    %v469 = vsel %vm467, %v463, -1e+30
    %470 = vmax.xlane.f32.xlu0 %v468
    %v471 = vpop.xlane.xlu0 %470
    %472 = vmax.xlane.f32.xlu0 %v469
    %v473 = vpop.xlane.xlu0 %472
    %v474 = vsub.f32 %v468, %v471
    %v475 = vsub.f32 %v469, %v473
    %v476 = vmul.f32 %v474, 1.442695
    %v477 = vpow.pop %v476
    %v478 = vmul.f32 %v475, 1.442695
    %v479 = vpow.pop %v478
    %480 = vadd.xlane.f32.xlu0 %v477
    %v481 = vpop.xlane.xlu0 %480
    %482 = vadd.xlane.f32.xlu0 %v479
    %v483 = vpop.xlane.xlu0 %482
    %v484 = vlog2.pop %v481
    %v485 = vmul.f32 %v484, 0.6931472
    %v486 = vlog2.pop %v483
    %v487 = vmul.f32 %v486, 0.6931472
    %v488 = vadd.f32 %v485, %v471
    %v489 = vadd.f32 %v487, %v473
    %v490 = vsub.f32 %v468, %v488
    %v491 = vsub.f32 %v469, %v489
    %492 = vst [vmem:[#allocation11] sm:$0xff] %v490
    %493 = vst [vmem:[#allocation11 + $0x8] sm:$0xff] %v491
    // Predicated region
    $region54: #{tpu_custom_call.1} parent=1 // pred_check
      _
    $region55: #{tpu_custom_call.1} parent=1 // pred_check_branch
      %495 = sbr.rel (0) target = $region57
    $region56: #{tpu_custom_call.1} parent=1 // pred_region
      %497 = vsyncadd [#allocation4], 0
      %s498 = sshll.u32 [#allocation11], 4
      %s499 = int_to_ptr.vmem [resolvable:$true] %s498
      %s500 = sshll.u32 %s8, 4
      %s501 = int_to_ptr.hbm [resolvable:$true] %s500
      %506 = dma.vmem_to_hbm [thread:$0]  %s499, 256, %s501, [#allocation4], 128, 128, 8
    $region57: #{tpu_custom_call.1} parent=1 // pred_fallthru
      _
    // Predicated region
    $region58: #{tpu_custom_call.1} parent=1 // pred_check
      _
    $region59: #{tpu_custom_call.1} parent=1 // pred_check_branch
      %508 = sbr.rel (0) target = $region61
    $region60: #{tpu_custom_call.1} parent=1 // pred_region
      %510 = dma.done [#allocation4], 256
    $region61: #{tpu_custom_call.1} parent=1 // pred_fallthru
      _
    %511 = vsyncpa [#allocation3], 1
    %512 = vsyncpa [#allocation6], 1
    %513 = vsyncpa [#allocation9], 1
    %514 = vsyncpa [#allocation4], 1

</llo_original>
